<compile_context>
chip_gen: v5e
topology: v5e:2x2
jax: 0.10.0
libtpu: 0.0.40
codegen_flags: <defaults>
</compile_context>

<pallas_src>
import math

import jax
import jax.numpy as jnp
from jax.experimental import pallas as pl
from jax.experimental.pallas import tpu as pltpu


def _copy_kernel(x_ref, o_ref):
    # Pure lane-dense copy of one (tb, tc) tile.
    o_ref[...] = x_ref[...]


def _cdiv(a, b):
    return -(-a // b)


def _choose_copy_geometry(n, flat, total):
    """Pick an exact 2-D factorization (R, C) of the contiguous buffer.

    Any factorization is correct (the kernel is an order-preserving copy of a
    contiguous buffer; the reshapes around it are metadata-only).  Prefer a
    lane-dense C (multiple of 128 -> unmasked vst) and a sublane-friendly R.
    """
    if flat % 128 == 0 and n % 8 == 0:
        return n, flat                      # already lane- and sublane-dense
    if total % 128 == 0:
        # Refactor into a lane-dense view: C divides total, C % 128 == 0,
        # C <= 8192 elements.
        width = 128 * math.gcd(total // 128, 64)
        return total // width, width
    # Odd element count: fall back to the logical shape (masked stores on the
    # trailing partial lanes; still correct).
    return n, flat


def _tile_plan(R, C, itemsize, target_tile_bytes, total_bytes):
    """Choose the (tb, tc) block for the (R, C) copy geometry."""
    sub = max(8, 32 // itemsize)            # sublane packing (8/16/32)
    row_bytes = max(1, C * itemsize)

    if row_bytes * sub > target_tile_bytes:
        # Even `sub` full-width rows exceed the tile budget: tile the column
        # axis too (tc % 128 == 0 -> legal partial last block, unmasked vst).
        tc = max(128, (target_tile_bytes // (sub * itemsize)) // 128 * 128)
        tb = sub
    else:
        tc = C
        tb = max(sub, (target_tile_bytes // row_bytes) // sub * sub)

    # Keep >= 4 grid steps for big copies so v7x's two TensorCores can split
    # the (parallel) grid and the DMA pipeline stays busy.
    if total_bytes > (4 << 20):
        while tb > sub and _cdiv(R, tb) * _cdiv(C, tc) < 4:
            tb = max(sub, ((tb // 2) // sub) * sub)

    # Clamping to the full dims is always layout-legal.
    return min(tb, R), min(tc, C), sub


def _vmem_limit(tile_bytes):
    try:
        vmem_cap = int(pltpu.get_tpu_info().vmem_capacity_bytes)
    except Exception:  # pragma: no cover - defensive: emulator / older jax
        vmem_cap = 64 * 1024 * 1024         # v7x per-TC physical VMEM (smallest)
    limit = 4 * tile_bytes + (8 << 20)      # double-buffered in + out + headroom
    return max(16 << 20, min(limit, (3 * vmem_cap) // 4))


def flatten(x, *, copy=True, donate=False, target_tile_bytes=8 * 1024 * 1024):
    """Equivalent of torch `x.view(x.size(0), -1)` for an N-D input (N >= 1).

    copy=False  -> metadata-only reshape (flatten is a view; zero HBM traffic).
    donate=True -> alias the input buffer to the output (only if the caller no
                   longer needs `x`).
    """
    n = x.shape[0]
    flat = int(math.prod(x.shape[1:])) if x.ndim > 1 else 1
    x2 = x.reshape(n, flat)                 # metadata-only for contiguous input

    if not copy:
        return x2

    total = n * flat
    if total == 0:
        return x2

    itemsize = jnp.dtype(x2.dtype).itemsize
    total_bytes = total * itemsize

    R, C = _choose_copy_geometry(n, flat, total)
    xg = x2.reshape(R, C)                   # metadata-only

    tb, tc, _ = _tile_plan(R, C, itemsize, target_tile_bytes, total_bytes)
    grid = (_cdiv(R, tb), _cdiv(C, tc))
    tile_bytes = tb * tc * itemsize

    out = pl.pallas_call(
        _copy_kernel,
        out_shape=jax.ShapeDtypeStruct((R, C), xg.dtype),
        grid_spec=pltpu.PrefetchScalarGridSpec(
            num_scalar_prefetch=0,
            grid=grid,
            in_specs=[pl.BlockSpec((tb, tc), lambda i, j: (i, j))],
            out_specs=pl.BlockSpec((tb, tc), lambda i, j: (i, j)),
        ),
        compiler_params=pltpu.CompilerParams(
            dimension_semantics=("parallel", "parallel"),
            vmem_limit_bytes=_vmem_limit(tile_bytes),
        ),
        cost_estimate=pl.CostEstimate(
            flops=0, transcendentals=0, bytes_accessed=2 * total_bytes),
        input_output_aliases=({0: 0} if donate else {}),
    )(xg)

    return out.reshape(n, flat)             # metadata-only


if __name__ == "__main__":
    key = jax.random.PRNGKey(0)
    x = jax.random.normal(key, (2, 4, 16, 16), dtype=jnp.float32)

    out = flatten(x)
    jax.block_until_ready(out)

    ref = x.reshape(x.shape[0], -1)
    assert out.shape == (2, 4 * 16 * 16)
    assert out.dtype == x.dtype
    assert jnp.array_equal(out, ref)

    # Zero-copy (view) path — the recommended production path.
    view = flatten(x, copy=False)
    assert jnp.array_equal(view, ref)

    # Extra shapes: odd element counts, lane-sparse flat, 1-D input, and a
    # copy large enough to exercise the multi-step (megacore-splittable) grid.
    for i, shape in enumerate([(16, 7, 5, 5), (4, 256), (5,), (64, 8, 64, 64)]):
        xi = jax.random.normal(jax.random.PRNGKey(i + 1), shape, jnp.float32)
        oi = flatten(xi)
        jax.block_until_ready(oi)
        assert jnp.array_equal(oi, xi.reshape(shape[0], -1))

    print("KERNEL_OK")
</pallas_src>

<mosaic_0001>
module attributes {stable_mosaic.version = 11 : i64} {
  func.func @_copy_kernel(%arg0: i32, %arg1: i32, %arg2: memref<1x2048xf32, #tpu.memory_space<vmem>>, %arg3: memref<1x2048xf32, #tpu.memory_space<vmem>>) attributes {dimension_semantics = [#tpu.dimension_semantics<parallel>, #tpu.dimension_semantics<parallel>], iteration_bounds = array<i64: 1, 1>, scalar_prefetch = 0 : i64, scratch_operands = 0 : i64, tpu.core_type = #tpu.core_type<tc>, window_params = [{transform_indices = @transform_0, window_bounds = array<i64: 1, 2048>}, {transform_indices = @transform_1, window_bounds = array<i64: 1, 2048>}]} {
    %c0 = arith.constant 0 : index
    %c0_0 = arith.constant 0 : index
    %0 = vector.load %arg2[%c0, %c0_0] : memref<1x2048xf32, #tpu.memory_space<vmem>>, vector<1x2048xf32>
    %c0_1 = arith.constant 0 : index
    %c0_2 = arith.constant 0 : index
    %1 = vector.load %arg3[%c0_1, %c0_2] : memref<1x2048xf32, #tpu.memory_space<vmem>>, vector<1x2048xf32>
    tpu.vector_store %arg3[%c0_1, %c0_2], %0 {strides = array<i32>} : memref<1x2048xf32, #tpu.memory_space<vmem>>, vector<1x2048xf32>,
    return
  }
  func.func @transform_0(%arg0: i32, %arg1: i32) -> (i32, i32) {
    %c0_i32 = arith.constant 0 : i32
    return %arg0, %arg1 : i32, i32
  }
  func.func @transform_1(%arg0: i32, %arg1: i32) -> (i32, i32) {
    %c0_i32 = arith.constant 0 : i32
    return %arg0, %arg1 : i32, i32
  }
}

</mosaic_0001>

<llo_original>
// kernel: tpu_custom_call.1
$region0: #{tpu_custom_call.1}
  #allocation0 [shape = 'u32[]', space=smem, size = 0x4, offset = 0x4, fixed_abs, tag = 'smem constant byte address 0x4 - core index']
  #allocation1 [shape = 'u32[72,128]{1,0:T(1,128)}', space=vmem, size = 0x9000, scoped, tag = 'internal scratch']
  %s0 = inlined_call_operand.hbm [shape: f32[1,2048], index: 0, kind: input, shape index: {}]
  %s1 = inlined_call_operand.hbm [shape: f32[1,2048], index: 1, kind: output, shape index: {}]
  %s2 = sld [smem:[#allocation0]]
  $region18: #{tpu_custom_call.1} parent=0
    _
  %s4 = ssub.s32 1, %s2
  %s5 = scalar_select 0, %s4, %s2
  $region1: #{tpu_custom_call.1} parent=0
    #allocation2 [shape = 'u8[8192]{0}', space=vmem, size = 0x2000, scoped, tag = 'input window, operand 0, single buffered']
    #allocation3 [shape = 's32[1]{0}', space=sflag, size = 0x4, scoped, tag = 'scoped memory for tpu_custom_call.1']
    #allocation4 [shape = 's32[1]{0}', space=sflag, size = 0x4, scoped, tag = 'scoped memory for tpu_custom_call.1']
    #allocation5 [shape = 'u8[8192]{0}', space=vmem, size = 0x2000, scoped, tag = 'output window, operand 0, single buffered']
    %6 = vsyncpa [#allocation3], 0
    %7 = vsyncpa [#allocation4], 0
    // Predicated region
    $region2: #{tpu_custom_call.1} parent=1 // pred_check
      _
    $region3: #{tpu_custom_call.1} parent=1 // pred_check_branch
      %9 = sbr.rel (0) target = $region5
    $region4: #{tpu_custom_call.1} parent=1 // pred_region
      %11 = vsyncadd [#allocation3], 0
      %s13 = sshll.u32 %s0, 4
      %s14 = int_to_ptr.hbm [resolvable:$true] %s13
      %s15 = sshll.u32 [#allocation2], 4
      %s16 = int_to_ptr.vmem [resolvable:$true] %s15
      %18 = dma.hbm_to_vmem [thread:$0]  %s14, 256, %s16, [#allocation3]
    $region5: #{tpu_custom_call.1} parent=1 // pred_fallthru
      _
    // Predicated region
    $region6: #{tpu_custom_call.1} parent=1 // pred_check
      _
    $region7: #{tpu_custom_call.1} parent=1 // pred_check_branch
      %20 = sbr.rel (0) target = $region9
    $region8: #{tpu_custom_call.1} parent=1 // pred_region
      %22 = dma.done [#allocation3], 256
    $region9: #{tpu_custom_call.1} parent=1 // pred_fallthru
      _
    %v23 = vld [vmem:[#allocation2] sm:$0xff]
    %v24 = vld [vmem:[#allocation2 + $0x8] sm:$0xff]
    %25 = vst [vmem:[#allocation5] sm:$0xff] %v23
    %26 = vst [vmem:[#allocation5 + $0x8] sm:$0xff] %v24
    // Predicated region
    $region10: #{tpu_custom_call.1} parent=1 // pred_check
      _
    $region11: #{tpu_custom_call.1} parent=1 // pred_check_branch
      %28 = sbr.rel (0) target = $region13
    $region12: #{tpu_custom_call.1} parent=1 // pred_region
      %30 = vsyncadd [#allocation4], 0
      %s32 = sshll.u32 [#allocation5], 4
      %s33 = int_to_ptr.vmem [resolvable:$true] %s32
      %s34 = sshll.u32 %s1, 4
      %s35 = int_to_ptr.hbm [resolvable:$true] %s34
      %37 = dma.vmem_to_hbm [thread:$0]  %s33, 256, %s35, [#allocation4]
    $region13: #{tpu_custom_call.1} parent=1 // pred_fallthru
      _
    // Predicated region
    $region14: #{tpu_custom_call.1} parent=1 // pred_check
      _
    $region15: #{tpu_custom_call.1} parent=1 // pred_check_branch
      %39 = sbr.rel (0) target = $region17
    $region16: #{tpu_custom_call.1} parent=1 // pred_region
      %41 = dma.done [#allocation4], 256
    $region17: #{tpu_custom_call.1} parent=1 // pred_fallthru
      _
    %42 = vsyncpa [#allocation3], 1
    %43 = vsyncpa [#allocation4], 1

</llo_original>
